<compile_context>
chip_gen: v5e
topology: v5e:2x2
jax: 0.10.0
libtpu: 0.0.40
codegen_flags: <defaults>
</compile_context>

<pallas_src>
import jax
import jax.numpy as jnp
from jax.experimental import pallas as pl
from jax.experimental.pallas import tpu as pltpu


def _round_up(n, m):
    return (n + m - 1) // m * m


def _bf16_exact(a):
    """Snap values to the bf16 grid (kept in f32) so the MXU's default
    bf16-input pass is exact and the demo correctness check can be tight."""
    return a.astype(jnp.bfloat16).astype(jnp.float32)


def _mlp_kernel(x_ref, w1_ref, b1_ref, w2_ref, b2_ref, o_ref):
    """x_ref:(F,TB)  w1_ref:(Hp,F)  b1_ref/w2_ref:(Hp,1)  b2_ref:(1,1) SMEM
    o_ref:(1,TB).  Computes y = w2 . relu(W1 @ x + b1) + b2, column-wise."""
    # fc1 on the MXU; f32 accumulation regardless of input dtype (f32 / bf16).
    h = jnp.dot(w1_ref[...], x_ref[...], preferred_element_type=jnp.float32)
    # Bias + ReLU epilogue in f32 (safe on v5e's f32-only VPU).
    h = jnp.maximum(h + b1_ref[...], 0.0)
    # fc2 (out_features == 1): VPU broadcast-multiply + sublane reduce (XLU)
    # instead of an N=1 MXU matmul.  b2 is a scalar read from SMEM.
    y = jnp.sum(h * w2_ref[...], axis=0, keepdims=True) + b2_ref[0, 0]
    o_ref[...] = y.astype(o_ref.dtype)


def simple_regressor_forward_t(x_t, w1, b1, w2, b2, *, block_b=8192):
    """Fused fc1 -> ReLU -> fc2 on a feature-major activation slab.

    x_t: (F, B) activations, feature-major (lane-dense batch stream)
    w1:  (H, F) fc1.weight (PyTorch layout)     b1: (H,) fc1.bias
    w2:  (1, H) fc2.weight (PyTorch layout)     b2: (1,) fc2.bias
    Returns (B, 1) float32.
    """
    F, B = x_t.shape
    H = w1.shape[0]
    assert w1.shape == (H, F) and b1.shape == (H,)
    assert w2.shape == (1, H) and b2.shape == (1,)

    # Pad hidden dim to a sublane multiple; zero rows are exact no-ops
    # (0-weight row -> h = 0 -> relu 0 -> * 0 in fc2).
    Hp = _round_up(max(H, 8), 8)
    w1p = jnp.pad(w1, ((0, Hp - H), (0, 0))).astype(jnp.float32)        # (Hp, F)
    b1c = jnp.pad(b1, (0, Hp - H)).reshape(Hp, 1).astype(jnp.float32)   # (Hp, 1)
    w2c = jnp.pad(w2[0], (0, Hp - H)).reshape(Hp, 1).astype(jnp.float32)
    b2s = b2.reshape(1, 1).astype(jnp.float32)                          # SMEM scalar

    # Only the fc1 matmul operand follows the activation dtype (e.g. bf16);
    # the bias/ReLU/fc2 epilogue always stays f32.
    if x_t.dtype != w1p.dtype:
        w1p = w1p.astype(x_t.dtype)

    # Batch tiling: TB lanes (= TB rows of the original problem) per grid
    # step; ragged last block handled by Pallas — no jnp.pad of x.
    TB = _round_up(min(int(block_b), _round_up(B, 128)), 128)
    grid = (pl.cdiv(B, TB),)

    cost = pl.CostEstimate(
        flops=int(2 * B * F * H + 4 * B * H),
        transcendentals=0,
        bytes_accessed=int(B * F * x_t.dtype.itemsize + B * 4
                           + (Hp * F + 2 * Hp + 1) * 4),
    )

    out_row = pl.pallas_call(
        _mlp_kernel,
        out_shape=jax.ShapeDtypeStruct((1, B), jnp.float32),
        grid=grid,
        in_specs=[
            pl.BlockSpec((F, TB), lambda i: (0, i)),            # x: streamed, lane-dense
            pl.BlockSpec((Hp, F), lambda i: (0, 0)),            # W1: VMEM-resident
            pl.BlockSpec((Hp, 1), lambda i: (0, 0)),            # b1: VMEM-resident
            pl.BlockSpec((Hp, 1), lambda i: (0, 0)),            # w2: VMEM-resident
            pl.BlockSpec(memory_space=pltpu.MemorySpace.SMEM),  # b2: scalar in SMEM
        ],
        out_specs=pl.BlockSpec((1, TB), lambda i: (0, i)),      # lane-dense output row
        compiler_params=pltpu.CompilerParams(
            dimension_semantics=("parallel",)),                 # v7x 2-TC grid sharding
        cost_estimate=cost,
    )(x_t, w1p, b1c, w2c, b2s)

    return out_row.reshape(B, 1)   # match the PyTorch module's (B, 1) output


def simple_regressor_forward(x, w1, b1, w2, b2, *, block_b=8192):
    """Convenience entry for row-major (B, F) activations.

    NOTE: a (B, 16) array is lane-padded 16 -> 128 in TPU HBM, so the
    transpose below is one relayout copy that buys a fully dense kernel
    stream; for peak performance the data pipeline should emit x
    feature-major and call simple_regressor_forward_t directly.
    """
    return simple_regressor_forward_t(x.T, w1, b1, w2, b2, block_b=block_b)


def init_params(key, input_size, hidden_size, output_size):
    """Deterministic init mimicking nn.Linear defaults, PyTorch weight layout."""
    k1, k2, k3, k4 = jax.random.split(key, 4)
    bound1 = 1.0 / jnp.sqrt(input_size)
    bound2 = 1.0 / jnp.sqrt(hidden_size)
    w1 = jax.random.uniform(k1, (hidden_size, input_size), jnp.float32, -bound1, bound1)
    b1 = jax.random.uniform(k2, (hidden_size,), jnp.float32, -bound1, bound1)
    w2 = jax.random.uniform(k3, (output_size, hidden_size), jnp.float32, -bound2, bound2)
    b2 = jax.random.uniform(k4, (output_size,), jnp.float32, -bound2, bound2)
    return w1, b1, w2, b2


if __name__ == "__main__":
    input_size = 16      # feature count after dropping 'true_val'
    hidden_size = 10     # as in the reference module
    output_size = 1

    key = jax.random.PRNGKey(0)
    kx1, kx2, kp = jax.random.split(key, 3)
    w1, b1, w2, b2 = init_params(kp, input_size, hidden_size, output_size)

    # Snap x and w1 (the MXU operands) to bf16-exact values so the default
    # MXU precision path is exact in BOTH kernel and reference -> tight check.
    w1 = _bf16_exact(w1)

    def ref_fwd(x):
        # Same math as the PyTorch forward; fc2 kept off the MXU so both
        # sides share an exact f32 epilogue.
        h = jnp.maximum(x @ w1.T + b1, 0.0)
        return (h * w2[0]).sum(axis=1, keepdims=True) + b2

    # 1) single-step grid, f32 path (row-major convenience wrapper)
    x_small = _bf16_exact(jax.random.uniform(kx1, (256, input_size), jnp.float32))
    out_small = jax.block_until_ready(simple_regressor_forward(x_small, w1, b1, w2, b2))
    assert out_small.shape == (256, output_size)
    assert jnp.allclose(out_small, ref_fwd(x_small), atol=1e-4, rtol=1e-4)

    # 2) multi-step ragged grid (B=200, TB=128 -> 2 steps, masked tail writes),
    #    feature-major entry point called directly (no wrapper relayout).
    x_big = _bf16_exact(jax.random.uniform(kx2, (200, input_size), jnp.float32))
    out_big = jax.block_until_ready(
        simple_regressor_forward_t(x_big.T, w1, b1, w2, b2, block_b=128))
    assert out_big.shape == (200, output_size)
    assert jnp.allclose(out_big, ref_fwd(x_big), atol=1e-4, rtol=1e-4)

    # 3) producer-supplied bf16 activations (no wrapper-side cast of x).
    out_bf16 = jax.block_until_ready(
        simple_regressor_forward(x_big.astype(jnp.bfloat16), w1, b1, w2, b2,
                                 block_b=128))
    assert jnp.allclose(out_bf16, ref_fwd(x_big), atol=1e-3, rtol=1e-3)

    print("KERNEL_OK")
</pallas_src>

<mosaic_0001>
module attributes {stable_mosaic.version = 11 : i64} {
  func.func @_mlp_kernel(%arg0: i32, %arg1: memref<16x256xf32, #tpu.memory_space<vmem>>, %arg2: memref<16x16xf32, #tpu.memory_space<vmem>>, %arg3: memref<16x1xf32, #tpu.memory_space<vmem>>, %arg4: memref<16x1xf32, #tpu.memory_space<vmem>>, %arg5: memref<1x1xf32, #tpu.memory_space<smem>>, %arg6: memref<1x256xf32, #tpu.memory_space<vmem>>) attributes {dimension_semantics = [#tpu.dimension_semantics<parallel>], iteration_bounds = array<i64: 1>, scalar_prefetch = 0 : i64, scratch_operands = 0 : i64, tpu.core_type = #tpu.core_type<tc>, window_params = [{transform_indices = @transform_0, window_bounds = array<i64: 16, 256>}, {pipeline_mode = #tpu.pipeline_mode<synchronous>, transform_indices = @transform_1, window_bounds = array<i64: 16, 16>}, {pipeline_mode = #tpu.pipeline_mode<synchronous>, transform_indices = @transform_2, window_bounds = array<i64: 16, 1>}, {pipeline_mode = #tpu.pipeline_mode<synchronous>, transform_indices = @transform_3, window_bounds = array<i64: 16, 1>}, {transform_indices = @transform_4, window_bounds = array<i64: 1, 1>}, {transform_indices = @transform_5, window_bounds = array<i64: 1, 256>}]} {
    %c0 = arith.constant 0 : index
    %c0_0 = arith.constant 0 : index
    %0 = vector.load %arg2[%c0, %c0_0] : memref<16x16xf32, #tpu.memory_space<vmem>>, vector<16x16xf32>
    %c0_1 = arith.constant 0 : index
    %c0_2 = arith.constant 0 : index
    %1 = vector.load %arg1[%c0_1, %c0_2] : memref<16x256xf32, #tpu.memory_space<vmem>>, vector<16x256xf32>
    %cst = arith.constant dense<0.000000e+00> : vector<16x256xf32>
    %2 = tpu.matmul %0, %1, %cst {dimension_numbers = #tpu.dot_dimension_numbers<[1], [0], [0], [1], [0, 0, 1, 1], [], []>} : vector<16x16xf32>, vector<16x256xf32>, vector<16x256xf32> -> vector<16x256xf32>
    %c0_3 = arith.constant 0 : index
    %c0_4 = arith.constant 0 : index
    %3 = vector.load %arg3[%c0_3, %c0_4] : memref<16x1xf32, #tpu.memory_space<vmem>>, vector<16x1xf32>
    %4 = vector.broadcast %3 : vector<16x1xf32> to vector<16x256xf32>
    %5 = arith.addf %2, %4 : vector<16x256xf32>
    %cst_5 = arith.constant 0.000000e+00 : f32
    %6 = vector.broadcast %cst_5 : f32 to vector<16x256xf32>
    %7 = arith.maximumf %5, %6 : vector<16x256xf32>
    %c0_6 = arith.constant 0 : index
    %c0_7 = arith.constant 0 : index
    %8 = vector.load %arg4[%c0_6, %c0_7] : memref<16x1xf32, #tpu.memory_space<vmem>>, vector<16x1xf32>
    %9 = vector.broadcast %8 : vector<16x1xf32> to vector<16x256xf32>
    %10 = arith.mulf %7, %9 : vector<16x256xf32>
    %cst_8 = arith.constant dense<0.000000e+00> : vector<256xf32>
    %11 = vector.multi_reduction <add>, %10, %cst_8 [0] : vector<16x256xf32> to vector<256xf32>
    %12 = vector.shape_cast %11 : vector<256xf32> to vector<1x256xf32>
    %c0_9 = arith.constant 0 : index
    %c0_10 = arith.constant 0 : index
    %13 = memref.load %arg5[%c0_9, %c0_10] : memref<1x1xf32, #tpu.memory_space<smem>>
    %14 = vector.broadcast %13 : f32 to vector<1x256xf32>
    %15 = arith.addf %12, %14 : vector<1x256xf32>
    %c0_11 = arith.constant 0 : index
    %c0_12 = arith.constant 0 : index
    %16 = vector.load %arg6[%c0_11, %c0_12] : memref<1x256xf32, #tpu.memory_space<vmem>>, vector<1x256xf32>
    tpu.vector_store %arg6[%c0_11, %c0_12], %15 {strides = array<i32>} : memref<1x256xf32, #tpu.memory_space<vmem>>, vector<1x256xf32>,
    return
  }
  func.func @transform_0(%arg0: i32) -> (i32, i32) {
    %c0_i32 = arith.constant 0 : i32
    %c0_i32_0 = arith.constant 0 : i32
    return %c0_i32, %arg0 : i32, i32
  }
  func.func @transform_1(%arg0: i32) -> (i32, i32) {
    %c0_i32 = arith.constant 0 : i32
    %c0_i32_0 = arith.constant 0 : i32
    %c0_i32_1 = arith.constant 0 : i32
    return %c0_i32, %c0_i32_0 : i32, i32
  }
  func.func @transform_2(%arg0: i32) -> (i32, i32) {
    %c0_i32 = arith.constant 0 : i32
    %c0_i32_0 = arith.constant 0 : i32
    %c0_i32_1 = arith.constant 0 : i32
    return %c0_i32, %c0_i32_0 : i32, i32
  }
  func.func @transform_3(%arg0: i32) -> (i32, i32) {
    %c0_i32 = arith.constant 0 : i32
    %c0_i32_0 = arith.constant 0 : i32
    %c0_i32_1 = arith.constant 0 : i32
    return %c0_i32, %c0_i32_0 : i32, i32
  }
  func.func @transform_4(%arg0: i32) -> (i32, i32) {
    %c0_i32 = arith.constant 0 : i32
    %c0_i32_0 = arith.constant 0 : i32
    %c0_i32_1 = arith.constant 0 : i32
    return %c0_i32, %c0_i32_0 : i32, i32
  }
  func.func @transform_5(%arg0: i32) -> (i32, i32) {
    %c0_i32 = arith.constant 0 : i32
    %c0_i32_0 = arith.constant 0 : i32
    return %c0_i32, %arg0 : i32, i32
  }
}

</mosaic_0001>

<llo_original>
// kernel: tpu_custom_call.1
$region0: #{tpu_custom_call.1}
  #allocation0 [shape = 'u32[]', space=smem, size = 0x4, offset = 0x4, fixed_abs, tag = 'smem constant byte address 0x4 - core index']
  #allocation1 [shape = 'u32[72,128]{1,0:T(1,128)}', space=vmem, size = 0x9000, scoped, tag = 'internal scratch']
  #allocation2 [shape = 'f32[1,1]{1,0:T(1,128)S(6)}', space=smem, size = 0x200, scoped, tag = 'scoped memory for tpu_custom_call.1']
  %s0 = inlined_call_operand.vmem [shape: f32[16,256], index: 0, kind: input, shape index: {}]
  %s1 = inlined_call_operand.hbm [shape: f32[16,16], index: 1, kind: input, shape index: {}]
  %s2 = inlined_call_operand.vmem [shape: f32[16,1], index: 2, kind: input, shape index: {}]
  %s3 = inlined_call_operand.vmem [shape: f32[16,1], index: 3, kind: input, shape index: {}]
  %s4 = inlined_call_operand.<no memory space> [shape: f32[1,1], index: 4, kind: input, shape index: {}]
  %s5 = inlined_call_operand.hbm [shape: f32[1,256], index: 5, kind: output, shape index: {}]
  %s6 = sld [smem:[#allocation0]]
  $region34: #{tpu_custom_call.1} parent=0
    _
  %s8 = ssub.s32 1, %s6
  %s9 = scalar_select 0, %s8, %s6
  %10 = sst [smem:[#allocation2]] %s4
  $region1: #{tpu_custom_call.1} parent=0
    #allocation3 [shape = 'u8[8192]{0}', space=vmem, size = 0x2000, scoped, tag = 'input window, operand 1, single buffered']
    #allocation4 [shape = 's32[1]{0}', space=sflag, size = 0x4, scoped, tag = 'scoped memory for tpu_custom_call.1']
    #allocation5 [shape = 's32[1]{0}', space=sflag, size = 0x4, scoped, tag = 'scoped memory for tpu_custom_call.1']
    #allocation6 [shape = 'u8[1024]{0}', space=vmem, size = 0x400, scoped, tag = 'output window, operand 0, single buffered']
    %11 = vsyncpa [#allocation4], 0
    %12 = vsyncpa [#allocation5], 0
    // Predicated region
    $region2: #{tpu_custom_call.1} parent=1 // pred_check
      _
    $region3: #{tpu_custom_call.1} parent=1 // pred_check_branch
      %14 = sbr.rel (0) target = $region5
    $region4: #{tpu_custom_call.1} parent=1 // pred_region
      _
    $region5: #{tpu_custom_call.1} parent=1 // pred_fallthru
      _
    // Predicated region
    $region6: #{tpu_custom_call.1} parent=1 // pred_check
      _
    $region7: #{tpu_custom_call.1} parent=1 // pred_check_branch
      %16 = sbr.rel (0) target = $region9
    $region8: #{tpu_custom_call.1} parent=1 // pred_region
      %18 = vsyncadd [#allocation4], 0
      %s19 = sshll.u32 %s1, 4
      %s20 = int_to_ptr.hbm [resolvable:$true] %s19
      %s21 = sshll.u32 [#allocation3], 4
      %s22 = int_to_ptr.vmem [resolvable:$true] %s21
      %27 = dma.hbm_to_vmem [thread:$0]  %s20, 256, %s22, [#allocation4], 128, 128, 8
    $region9: #{tpu_custom_call.1} parent=1 // pred_fallthru
      _
    // Predicated region
    $region10: #{tpu_custom_call.1} parent=1 // pred_check
      _
    $region11: #{tpu_custom_call.1} parent=1 // pred_check_branch
      %29 = sbr.rel (0) target = $region13
    $region12: #{tpu_custom_call.1} parent=1 // pred_region
      _
    $region13: #{tpu_custom_call.1} parent=1 // pred_fallthru
      _
    // Predicated region
    $region14: #{tpu_custom_call.1} parent=1 // pred_check
      _
    $region15: #{tpu_custom_call.1} parent=1 // pred_check_branch
      %31 = sbr.rel (0) target = $region17
    $region16: #{tpu_custom_call.1} parent=1 // pred_region
      _
    $region17: #{tpu_custom_call.1} parent=1 // pred_fallthru
      _
    // Predicated region
    $region18: #{tpu_custom_call.1} parent=1 // pred_check
      _
    $region19: #{tpu_custom_call.1} parent=1 // pred_check_branch
      %33 = sbr.rel (0) target = $region21
    $region20: #{tpu_custom_call.1} parent=1 // pred_region
      _
    $region21: #{tpu_custom_call.1} parent=1 // pred_fallthru
      _
    // Predicated region
    $region22: #{tpu_custom_call.1} parent=1 // pred_check
      _
    $region23: #{tpu_custom_call.1} parent=1 // pred_check_branch
      %35 = sbr.rel (0) target = $region25
    $region24: #{tpu_custom_call.1} parent=1 // pred_region
      %37 = dma.done [#allocation4], 256
    $region25: #{tpu_custom_call.1} parent=1 // pred_fallthru
      _
    %v38 = vld [vmem:[#allocation3] sm:$0xff]
    %v39 = vld [vmem:[#allocation3 + $0x8] sm:$0xff]
    %v40 = vld [vmem:[%s0] sm:$0xff]
    %v41 = vld [vmem:[%s0 + $0x8] sm:$0xff]
    %v42 = vld [vmem:[%s0 + $0x10] sm:$0xff]
    %v43 = vld [vmem:[%s0 + $0x18] sm:$0xff]
    %v44 = vld [vmem:[%s2] sm:$0xff]
    %v45 = vld [vmem:[%s2 + $0x8] sm:$0xff]
    %47 = vset.pattern.permute.xlu0 0
    %48 = vperm.xlu0 %47, %v44
    %v49 = vpop.permute.xlu0 %48
    %52 = vset.pattern.permute.xlu0 0
    %53 = vperm.xlu0 %52, %v45
    %v54 = vpop.permute.xlu0 %53
    %vm56 = vcmask 130048
    %v58 = vsel %vm56, %v38, 0
    %v61 = vsel %vm56, %v39, 0
    %63 = vmatpush.msra.mxu0 0.0
    %64 = vmatpush.msra.mxu0 0.0
    %65 = vmatpush.msra.mxu0 0.0
    %66 = vmatpush.msra.mxu0 0.0
    %67 = vmatpush.msra.mxu0 0.0
    %68 = vmatpush.msra.mxu0 0.0
    %69 = vmatpush.msra.mxu0 0.0
    %70 = vmatpush.msra.mxu0 0.0
    %71 = vmatpush.msra.mxu0 0.0
    %72 = vmatpush.msra.mxu0 0.0
    %73 = vmatpush.msra.mxu0 0.0
    %74 = vmatpush.msra.mxu0 0.0
    %75 = vmatpush.msra.mxu0 0.0
    %76 = vmatpush.msra.mxu0 0.0
    %77 = vmatpush.msra.mxu0 %v42
    %78 = vmatpush.msra.mxu0 %v40
    %79 = vmatmul.f32.gmra.mxu0 %v58
    %v80 = vpop.f32.mrf.mxu0
    %v81 = vadd.f32 %v49, %v80
    %82 = vmatmul.f32.gmra.mxu0 %v61
    %v83 = vpop.f32.mrf.mxu0
    %v84 = vadd.f32 %v54, %v83
    %85 = vdwg.mxu0
    %86 = vmatpush.msra.mxu0 0.0
    %87 = vmatpush.msra.mxu0 0.0
    %88 = vmatpush.msra.mxu0 0.0
    %89 = vmatpush.msra.mxu0 0.0
    %90 = vmatpush.msra.mxu0 0.0
    %91 = vmatpush.msra.mxu0 0.0
    %92 = vmatpush.msra.mxu0 0.0
    %93 = vmatpush.msra.mxu0 0.0
    %94 = vmatpush.msra.mxu0 0.0
    %95 = vmatpush.msra.mxu0 0.0
    %96 = vmatpush.msra.mxu0 0.0
    %97 = vmatpush.msra.mxu0 0.0
    %98 = vmatpush.msra.mxu0 0.0
    %99 = vmatpush.msra.mxu0 0.0
    %100 = vmatpush.msra.mxu0 %v43
    %101 = vmatpush.msra.mxu0 %v41
    %102 = vmatmul.f32.gmra.mxu0 %v58
    %v103 = vpop.f32.mrf.mxu0
    %v104 = vadd.f32 %v49, %v103
    %105 = vmatmul.f32.gmra.mxu0 %v61
    %v106 = vpop.f32.mrf.mxu0
    %v107 = vadd.f32 %v54, %v106
    %108 = vdwg.mxu0
    %v109 = vmax.f32 %v81, 0.0
    %v110 = vmax.f32 %v104, 0.0
    %v111 = vmax.f32 %v84, 0.0
    %v112 = vmax.f32 %v107, 0.0
    %v113 = vld [vmem:[%s3] sm:$0xff]
    %v114 = vld [vmem:[%s3 + $0x8] sm:$0xff]
    %116 = vset.pattern.permute.xlu0 0
    %117 = vperm.xlu0 %116, %v113
    %v118 = vpop.permute.xlu0 %117
    %121 = vset.pattern.permute.xlu0 0
    %122 = vperm.xlu0 %121, %v114
    %v123 = vpop.permute.xlu0 %122
    %v125 = vmul.f32 %v109, %v118
    %v126 = vmul.f32 %v110, %v118
    %v127 = vmul.f32 %v111, %v123
    %v128 = vmul.f32 %v112, %v123
    %v129 = vadd.f32 %v125, %v127
    %v130 = vrot.slane %v129, 4
    %v131 = vadd.f32 %v129, %v130
    %v132 = vrot.slane %v131, 2
    %v133 = vadd.f32 %v131, %v132
    %v134 = vrot.slane %v133, 1
    %v135 = vadd.f32 %v133, %v134
    %v136 = vadd.f32 %v126, %v128
    %v137 = vrot.slane %v136, 4
    %v138 = vadd.f32 %v136, %v137
    %v139 = vrot.slane %v138, 2
    %v140 = vadd.f32 %v138, %v139
    %v141 = vrot.slane %v140, 1
    %v142 = vadd.f32 %v140, %v141
    %s143 = sld [smem:[#allocation2]]
    %v144 = vstv %s143
    %v145 = vadd.f32 %v135, %v144
    %v146 = vadd.f32 %v142, %v144
    %v149 = vrot.slane %v146, 7
    %vm150 = vcmask 1040384
    %v151 = vsel %vm150, %v145, %v149
    %v153 = vlaneseq
    %vm154 = vcmp.ge.s32.totalorder %v153, 0
    %vm155 = vcmp.lt.s32.totalorder %v153, 256
    %vm156 = vmand %vm154, %vm155
    %157 = vst.msk [vmem:[#allocation6] sm:$0x3] %vm156, %v151
    // Predicated region
    $region26: #{tpu_custom_call.1} parent=1 // pred_check
      _
    $region27: #{tpu_custom_call.1} parent=1 // pred_check_branch
      %159 = sbr.rel (0) target = $region29
    $region28: #{tpu_custom_call.1} parent=1 // pred_region
      %161 = vsyncadd [#allocation5], 0
      %s163 = sshll.u32 [#allocation6], 4
      %s164 = int_to_ptr.vmem [resolvable:$true] %s163
      %s165 = sshll.u32 %s5, 4
      %s166 = int_to_ptr.hbm [resolvable:$true] %s165
      %168 = dma.vmem_to_hbm [thread:$0]  %s164, 32, %s166, [#allocation5]
    $region29: #{tpu_custom_call.1} parent=1 // pred_fallthru
      _
    // Predicated region
    $region30: #{tpu_custom_call.1} parent=1 // pred_check
      _
    $region31: #{tpu_custom_call.1} parent=1 // pred_check_branch
      %170 = sbr.rel (0) target = $region33
    $region32: #{tpu_custom_call.1} parent=1 // pred_region
      %172 = dma.done [#allocation5], 32
    $region33: #{tpu_custom_call.1} parent=1 // pred_fallthru
      _
    %173 = vsyncpa [#allocation4], 1
    %174 = vsyncpa [#allocation5], 1

</llo_original>
